<compile_context>
chip_gen: v6e
topology: v6e:2x2x1
jax: 0.10.0
libtpu: 0.0.40
codegen_flags: <defaults>
</compile_context>

<pallas_src>
import functools
import math

import jax
import jax.numpy as jnp
from jax import lax
from jax.experimental import pallas as pl
from jax.experimental.pallas import tpu as pltpu

_LANE = 128
_TM_MAX = 4096                      # max rows per tile
_VMEM_INPUT_BUDGET = 12 * 1024 * 1024   # double-buffered input bytes; safe for v5e's 16 MiB default
_EPS = 1e-12                        # matches SigmoidBinaryCrossEntropyLoss(from_sigmoid=True)
_IGNORE = -1.0                      # ignore_label


def _bce_sum_kernel(pred_ref, label_ref, out_ref, *,
                    rows, tm, nt_per, needs_mask, single_log):
    """Accumulates per-(batch, core-split) lane-wise sums of masked BCE elements.

    pred_ref / label_ref : (1, tm, L) VMEM tiles of the (B, rows, L) slabs.
    out_ref              : (1, 1, L) resident output block (accumulator, init at j==0).
    """
    c = pl.program_id(1)
    j = pl.program_id(2)

    @pl.when(j == 0)
    def _init():
        out_ref[...] = jnp.zeros_like(out_ref)

    pred = pred_ref[0].astype(jnp.float32)      # f32 compute: eps=1e-12 would flush in bf16
    label = label_ref[0].astype(jnp.float32)

    valid = label != _IGNORE                    # ignore_label mask
    if needs_mask:
        # Fold the partial-/replayed-tile row mask into the same single select.
        row0 = (c * nt_per + j) * tm            # unclamped global tile row offset
        ri = row0 + lax.broadcasted_iota(jnp.int32, pred.shape, 0)
        valid = jnp.logical_and(valid, ri < rows)

    if single_log:
        # Exact for labels in {0, 1}; ignored (-1) pixels are discarded by `valid`.
        picked = jnp.where(label > 0.5, pred, 1.0 - pred)
        le = -jnp.log(picked + _EPS)
    else:
        lab = jnp.where(valid, label, 0.0)
        le = -(jnp.log(pred + _EPS) * lab
               + jnp.log(1.0 - pred + _EPS) * (1.0 - lab))

    # Select (NOT multiply): garbage in padded rows may yield NaN from the log.
    le = jnp.where(valid, le, 0.0)

    # Per-tile sublane reduce (XLU) straight into the resident output block.
    out_ref[...] += jnp.sum(le, axis=0, keepdims=True)[None]


def sigmoid_bce_loss(pred, label, *, assume_binary_labels=False, tm_max=_TM_MAX):
    """SigmoidBinaryCrossEntropyLoss(from_sigmoid=True, ignore_label=-1):
    per-batch mean of the masked BCE, computed by one Pallas reduction kernel."""
    label = label.reshape(pred.shape)           # mirrors label.view(pred.size())
    b = pred.shape[0]
    n = math.prod(pred.shape[1:])               # per-batch element count (mean divisor)

    # Free (contiguous) reshape into a kernel-friendly (B, rows, L) layout — no HBM copy.
    if n % _LANE == 0:
        L = _LANE                               # perfectly lane-dense slab
    else:
        L = pred.shape[-1]                      # natural layout: W becomes the lane dim
    rows = n // L
    p3 = pred.reshape(b, rows, L)
    l3 = label.reshape(b, rows, L)

    # Row-tile size: as large as the double-buffered VMEM budget allows.
    lanes_pad = pl.cdiv(L, _LANE) * _LANE
    row_bytes = lanes_pad * (p3.dtype.itemsize + l3.dtype.itemsize)
    budget_rows = _VMEM_INPUT_BUDGET // (2 * row_bytes)     # 2x for double buffering
    cap = min(tm_max, _TM_MAX, max(8, budget_rows))
    if rows <= cap:
        tm, nt = rows, 1                        # single exact tile (block == full array dim)
    else:
        tm = max(32, (cap // 32) * 32)          # mult of 32: safe for f32/bf16/int8 native tiling
        nt = pl.cdiv(rows, tm)

    # When the batch axis can't feed both v7x TensorCores, split the reduction instead.
    ncores = 2 if (b == 1 and nt >= 2) else 1
    nt_per = pl.cdiv(nt, ncores)
    needs_mask = (ncores * nt_per * tm) != rows

    def in_map(bb, cc, jj):
        # Clamp replayed tiles (when nt doesn't divide evenly); they are masked to 0 in-kernel.
        t = jnp.minimum(cc * nt_per + jj, nt - 1)
        return (bb, t, 0)

    in_spec = pl.BlockSpec((1, tm, L), in_map)
    out_spec = pl.BlockSpec((1, 1, L), lambda bb, cc, jj: (bb, cc, 0))

    partial = pl.pallas_call(
        functools.partial(_bce_sum_kernel, rows=rows, tm=tm, nt_per=nt_per,
                          needs_mask=needs_mask, single_log=assume_binary_labels),
        out_shape=jax.ShapeDtypeStruct((b, ncores, L), jnp.float32),
        grid_spec=pltpu.PrefetchScalarGridSpec(
            num_scalar_prefetch=0,
            grid=(b, ncores, nt_per),
            in_specs=[in_spec, in_spec],
            out_specs=out_spec,
        ),
        compiler_params=pltpu.CompilerParams(
            dimension_semantics=("parallel", "parallel", "arbitrary")),
    )(p3, l3)

    # Tiny lane-sum + mean divide in the wrapper.
    return jnp.sum(partial, axis=(1, 2)) / n


class OracleMaskLoss:
    """JAX/Pallas port of OracleMaskLoss; the loss math runs in the Pallas kernel."""

    def __init__(self):
        self.gt_mask = None
        self.loss = sigmoid_bce_loss
        self.predictor = None
        self.history = []
        self._binary_labels = False
        self._gt_cat2 = None

    def set_gt_mask(self, gt_mask):
        gt_mask = jnp.asarray(gt_mask)
        # One-time check (gt is reused across many forward calls): binary {0,1,-1} masks
        # get bf16 storage (exact) -> half the label HBM traffic + single-log kernel path.
        is_binary = bool(jnp.all((gt_mask == 0.0) | (gt_mask == 1.0) | (gt_mask == _IGNORE)))
        if is_binary and jnp.issubdtype(gt_mask.dtype, jnp.floating):
            gt_mask = gt_mask.astype(jnp.bfloat16)
        self.gt_mask = gt_mask
        self._binary_labels = is_binary
        self._gt_cat2 = None
        self.history = []

    def __call__(self, result, pos_mask, neg_mask):
        return self.forward(result, pos_mask, neg_mask)

    def forward(self, result, pos_mask, neg_mask):
        del pos_mask, neg_mask  # part of the interface, unused by the loss (as in the original)
        gt_mask = self.gt_mask
        if self.predictor is not None and getattr(self.predictor, "object_roi", None) is not None:
            # TODO(synk): predictor.object_roi crop + bilinear F.interpolate branch is host-side
            # predictor state; only the (default) object_roi-is-None path is implemented.
            raise NotImplementedError("object_roi cropping path not implemented")
        if result.shape[0] == 2:
            # gt is fixed between set_gt_mask calls: flip+concat once (narrow dtype), then cache.
            if self._gt_cat2 is None:
                self._gt_cat2 = jnp.concatenate([gt_mask, jnp.flip(gt_mask, axis=3)], axis=0)
            gt_mask = self._gt_cat2
        loss = self.loss(result, gt_mask, assume_binary_labels=self._binary_labels)
        # Keep history entries as device scalars: no blocking host transfer per call.
        self.history.append(loss[0])
        if len(self.history) > 5 and abs(float(self.history[-5]) - float(self.history[-1])) < 1e-5:
            return 0, 0, 0
        return loss, 1.0, 1.0


# ---------------------------- pure-JAX references ----------------------------
def _reference_bce(pred, label):
    pred = pred.astype(jnp.float32)
    label = label.astype(jnp.float32).reshape(pred.shape)
    sw = label != _IGNORE
    lab = jnp.where(sw, label, 0.0)
    le = -(jnp.log(pred + _EPS) * lab + jnp.log(1.0 - pred + _EPS) * (1.0 - lab))
    le = jnp.where(sw, le, 0.0)
    return jnp.mean(le.reshape(pred.shape[0], -1), axis=1)


def _reference_forward(result, gt_mask):
    if result.shape[0] == 2:
        gt_mask = jnp.concatenate([gt_mask, jnp.flip(gt_mask, axis=3)], axis=0)
    return _reference_bce(result, gt_mask)


if __name__ == "__main__":
    key = jax.random.PRNGKey(0)
    k1, k2, k3 = jax.random.split(key, 3)

    # result: post-sigmoid probabilities, batch=2 (exercises the flip+concat path);
    # gt_mask: batch=1 binary mask with some ignore (-1) pixels; click maps unused by the loss.
    B, C, H, W = 2, 1, 32, 32
    result = jax.random.uniform(k1, (B, C, H, W), dtype=jnp.float32,
                                minval=0.02, maxval=0.98)
    gt_bits = (jax.random.uniform(k2, (1, C, H, W)) > 0.5).astype(jnp.float32)
    ignore = jax.random.uniform(k3, (1, C, H, W)) > 0.9
    gt_mask = jnp.where(ignore, _IGNORE, gt_bits)
    pos_mask = jnp.zeros((B, C, H, W), jnp.float32)
    neg_mask = jnp.zeros((B, C, H, W), jnp.float32)

    crit = OracleMaskLoss()
    crit.set_gt_mask(gt_mask)
    loss, f1, f2 = crit(result, pos_mask, neg_mask)
    jax.block_until_ready(loss)

    ref = _reference_forward(result, gt_mask)
    assert loss.shape == (B,)
    assert jnp.allclose(loss, ref, rtol=1e-5, atol=1e-5), (loss, ref)
    assert f1 == 1.0 and f2 == 1.0

    # Extra shape/path coverage: natural non-aligned layout, partial row tiles,
    # multi-tile reduction, single-log path, and the B==1 two-core split (+clamp).
    extra = [
        ((2, 1, 24, 24), 4096, False),   # non-128-aligned -> (C*H, W) layout, one exact tile
        ((2, 3, 17, 19), 4096, False),   # non-aligned odd dims, tiny lanes
        ((2, 1, 48, 128), 32, False),    # aligned, 2 tiles, last tile partial -> row mask
        ((1, 1, 64, 128), 32, True),     # B=1 -> 2-way core split, even tiles, single-log path
        ((1, 1, 80, 128), 32, True),     # B=1 core split with odd tile count -> clamp + mask
    ]
    for idx, (shape, tmx, binary) in enumerate(extra):
        ka, kb, kc = jax.random.split(jax.random.fold_in(key, idx + 1), 3)
        p = jax.random.uniform(ka, shape, dtype=jnp.float32, minval=0.02, maxval=0.98)
        lbits = (jax.random.uniform(kb, shape) > 0.5).astype(jnp.float32)
        lbl = jnp.where(jax.random.uniform(kc, shape) > 0.9, _IGNORE, lbits)
        got = sigmoid_bce_loss(p, lbl, assume_binary_labels=binary, tm_max=tmx)
        want = _reference_bce(p, lbl)
        jax.block_until_ready(got)
        assert got.shape == (shape[0],)
        assert jnp.allclose(got, want, rtol=1e-5, atol=1e-5), (shape, got, want)

    print("KERNEL_OK")
</pallas_src>

<mosaic_0001>
module attributes {stable_mosaic.version = 11 : i64} {
  func.func @_bce_sum_kernel(%arg0: i32, %arg1: i32, %arg2: i32, %arg3: memref<1x8x128xf32, #tpu.memory_space<vmem>>, %arg4: memref<1x8x128xbf16, #tpu.memory_space<vmem>>, %arg5: memref<1x1x128xf32, #tpu.memory_space<vmem>>) attributes {dimension_semantics = [#tpu.dimension_semantics<parallel>, #tpu.dimension_semantics<parallel>, #tpu.dimension_semantics<arbitrary>], iteration_bounds = array<i64: 2, 1, 1>, scalar_prefetch = 0 : i64, scratch_operands = 0 : i64, tpu.core_type = #tpu.core_type<tc>, window_params = [{transform_indices = @transform_0, window_bounds = array<i64: 1, 8, 128>}, {transform_indices = @transform_1, window_bounds = array<i64: 1, 8, 128>}, {transform_indices = @transform_2, window_bounds = array<i64: 1, 1, 128>}]} {
    %c0_i32 = arith.constant 0 : i32
    %0 = arith.cmpi eq, %arg2, %c0_i32 : i32
    %1 = arith.extui %0 : i1 to i32
    %c0_i32_0 = arith.constant 0 : i32
    %2 = arith.cmpi ne, %1, %c0_i32_0 : i32
    scf.if %2 {
      %cst_18 = arith.constant 0.000000e+00 : f32
      %28 = vector.broadcast %cst_18 : f32 to vector<1x1x128xf32>
      %c0_19 = arith.constant 0 : index
      %c0_20 = arith.constant 0 : index
      %c0_21 = arith.constant 0 : index
      %29 = vector.load %arg5[%c0_19, %c0_20, %c0_21] : memref<1x1x128xf32, #tpu.memory_space<vmem>>, vector<1x1x128xf32>
      tpu.vector_store %arg5[%c0_19, %c0_20, %c0_21], %28 {strides = array<i32>} : memref<1x1x128xf32, #tpu.memory_space<vmem>>, vector<1x1x128xf32>,
    } else {
    }
    %c0 = arith.constant 0 : index
    %c0_1 = arith.constant 0 : index
    %c0_2 = arith.constant 0 : index
    %3 = vector.load %arg3[%c0, %c0_1, %c0_2] : memref<1x8x128xf32, #tpu.memory_space<vmem>>, vector<1x8x128xf32>
    %4 = vector.shape_cast %3 : vector<1x8x128xf32> to vector<8x128xf32>
    %c0_3 = arith.constant 0 : index
    %c0_4 = arith.constant 0 : index
    %c0_5 = arith.constant 0 : index
    %5 = vector.load %arg4[%c0_3, %c0_4, %c0_5] : memref<1x8x128xbf16, #tpu.memory_space<vmem>>, vector<1x8x128xbf16>
    %6 = vector.shape_cast %5 : vector<1x8x128xbf16> to vector<8x128xbf16>
    %7 = arith.extf %6 : vector<8x128xbf16> to vector<8x128xf32>
    %cst = arith.constant -1.000000e+00 : f32
    %8 = vector.broadcast %cst : f32 to vector<8x128xf32>
    %9 = arith.cmpf one, %7, %8 : vector<8x128xf32>
    %cst_6 = arith.constant 5.000000e-01 : f32
    %10 = vector.broadcast %cst_6 : f32 to vector<8x128xf32>
    %11 = arith.cmpf ogt, %7, %10 : vector<8x128xf32>
    %cst_7 = arith.constant 1.000000e+00 : f32
    %12 = vector.broadcast %cst_7 : f32 to vector<8x128xf32>
    %13 = arith.subf %12, %4 : vector<8x128xf32>
    %14 = arith.select %11, %4, %13 : vector<8x128xi1>, vector<8x128xf32>
    %cst_8 = arith.constant 9.99999996E-13 : f32
    %15 = vector.broadcast %cst_8 : f32 to vector<8x128xf32>
    %16 = arith.addf %14, %15 : vector<8x128xf32>
    %17 = math.log %16 : vector<8x128xf32>
    %cst_9 = arith.constant 0.000000e+00 : f32
    %18 = vector.broadcast %cst_9 : f32 to vector<8x128xf32>
    %19 = arith.subf %18, %17 : vector<8x128xf32>
    %cst_10 = arith.constant 0.000000e+00 : f32
    %20 = vector.broadcast %cst_10 : f32 to vector<8x128xf32>
    %21 = arith.select %9, %19, %20 : vector<8x128xi1>, vector<8x128xf32>
    %c0_11 = arith.constant 0 : index
    %c0_12 = arith.constant 0 : index
    %c0_13 = arith.constant 0 : index
    %22 = vector.load %arg5[%c0_11, %c0_12, %c0_13] : memref<1x1x128xf32, #tpu.memory_space<vmem>>, vector<1x1x128xf32>
    %cst_14 = arith.constant dense<0.000000e+00> : vector<128xf32>
    %23 = vector.multi_reduction <add>, %21, %cst_14 [0] : vector<8x128xf32> to vector<128xf32>
    %24 = vector.shape_cast %23 : vector<128xf32> to vector<1x128xf32>
    %25 = vector.shape_cast %24 : vector<1x128xf32> to vector<1x1x128xf32>
    %26 = arith.addf %22, %25 : vector<1x1x128xf32>
    %c0_15 = arith.constant 0 : index
    %c0_16 = arith.constant 0 : index
    %c0_17 = arith.constant 0 : index
    %27 = vector.load %arg5[%c0_15, %c0_16, %c0_17] : memref<1x1x128xf32, #tpu.memory_space<vmem>>, vector<1x1x128xf32>
    tpu.vector_store %arg5[%c0_15, %c0_16, %c0_17], %26 {strides = array<i32>} : memref<1x1x128xf32, #tpu.memory_space<vmem>>, vector<1x1x128xf32>,
    return
  }
  func.func @transform_0(%arg0: i32, %arg1: i32, %arg2: i32) -> (i32, i32, i32) {
    %c1_i32 = arith.constant 1 : i32
    %0 = arith.muli %arg1, %c1_i32 : i32
    %1 = arith.addi %0, %arg2 : i32
    %c0_i32 = arith.constant 0 : i32
    %2 = arith.minsi %1, %c0_i32 : i32
    %c0_i32_0 = arith.constant 0 : i32
    %c0_i32_1 = arith.constant 0 : i32
    return %arg0, %2, %c0_i32_0 : i32, i32, i32
  }
  func.func @transform_1(%arg0: i32, %arg1: i32, %arg2: i32) -> (i32, i32, i32) {
    %c1_i32 = arith.constant 1 : i32
    %0 = arith.muli %arg1, %c1_i32 : i32
    %1 = arith.addi %0, %arg2 : i32
    %c0_i32 = arith.constant 0 : i32
    %2 = arith.minsi %1, %c0_i32 : i32
    %c0_i32_0 = arith.constant 0 : i32
    %c0_i32_1 = arith.constant 0 : i32
    return %arg0, %2, %c0_i32_0 : i32, i32, i32
  }
  func.func @transform_2(%arg0: i32, %arg1: i32, %arg2: i32) -> (i32, i32, i32) {
    %c0_i32 = arith.constant 0 : i32
    %c0_i32_0 = arith.constant 0 : i32
    return %arg0, %arg1, %c0_i32 : i32, i32, i32
  }
}

</mosaic_0001>

<llo_original>
// kernel: tpu_custom_call.1
$region0: #{tpu_custom_call.1}
  #allocation0 [shape = 'u32[]', space=smem, size = 0x4, offset = 0x4, fixed_abs, tag = 'smem constant byte address 0x4 - core index']
  #allocation1 [shape = 'u32[144,128]{1,0:T(1,128)}', space=vmem, size = 0x12000, scoped, tag = 'internal scratch']
  %s0 = inlined_call_operand.hbm [shape: f32[2,8,128], index: 0, kind: input, shape index: {}]
  %s1 = inlined_call_operand.hbm [shape: bf16[2,8,128], index: 1, kind: input, shape index: {}]
  %s2 = inlined_call_operand.hbm [shape: f32[2,1,128], index: 2, kind: output, shape index: {}]
  %s3 = sld [smem:[#allocation0]]
  $region53: #{tpu_custom_call.1} parent=0
    _
  %s5 = ssub.s32 1, %s3
  %s6 = scalar_select 0, %s5, %s3
  $region1: #{tpu_custom_call.1} parent=0
    #allocation2 [shape = 'u8[8192]{0}', space=vmem, size = 0x2000, scoped, tag = 'input window, operand 0']
    #allocation3 [shape = 's32[2]{0}', space=sflag, size = 0x8, scoped, tag = 'scoped memory for tpu_custom_call.1']
    #allocation4 [shape = 's32[2]{0}', space=sflag, size = 0x8, scoped, tag = 'scoped memory for tpu_custom_call.1']
    #allocation5 [shape = 'u8[4096]{0}', space=vmem, size = 0x1000, scoped, tag = 'input window, operand 1']
    #allocation6 [shape = 's32[2]{0}', space=sflag, size = 0x8, scoped, tag = 'scoped memory for tpu_custom_call.1']
    #allocation7 [shape = 'u8[1024]{0}', space=vmem, size = 0x400, scoped, tag = 'output window, operand 0']
    %7 = vsyncpa [#allocation3], 0
    %s8 = scalar_lea.sflag [#allocation3], 1
    %9 = vsyncpa %s8, 0
    %10 = vsyncpa [#allocation6], 0
    %s11 = scalar_lea.sflag [#allocation6], 1
    %12 = vsyncpa %s11, 0
    %13 = vsyncpa [#allocation4], 0
    %s14 = scalar_lea.sflag [#allocation4], 1
    %15 = vsyncpa %s14, 0
    loop: start=0, step=1, limit=4
    $region2: #{tpu_custom_call.1} parent=1 // loop_pre_header
      _
    $region3: #{tpu_custom_call.1} parent=1 // loop_header
      %s17 = sphi 0, %s21
      %p18 = scmp.ge.s32.totalorder %s17, 4
      %s24 = sphi 0, %s43
      %s25 = sphi 0, %s39
      %s26 = sphi 0, %s35
      %s27 = sphi 0, %s24
      %s28 = sphi 0, %s25
      %s29 = sphi 0, %s26
      %s30 = sphi 0, %s27
      %s31 = sphi 0, %s28
      %s32 = sphi 0, %s29
      %s54 = sphi 0, %s56
      %s57 = sphi 0, %s54
      %s58 = sphi 0, %s57
      %s74 = sphi 0, %s58
      %s88 = sphi 0, %s90
      %s91 = sphi 0, %s88
      %s92 = sphi 0, %s91
      %s108 = sphi 0, %s92
      %s116 = sphi 0, %s118
      %s119 = sphi 0, %s116
      %s120 = sphi 0, %s119
      %s136 = sphi 0, %s120
    $region4: #{tpu_custom_call.1} parent=1 // loop_header_branch
      %20 = sbr.rel (%p18) target = $region8
    $region5: #{tpu_custom_call.1} parent=1 // loop_body
      %s22 = ssub.s32 %s17, 1
      %s23 = ssub.s32 %s17, 2
      %s33 = sadd.s32 1, %s26
      %p34 = scmp.ge.s32.totalorder %s33, 1
      %s35 = scalar_select %p34, 0, %s33
      %s36 = sadd.s32 1, %s25
      %s37 = scalar_select %p34, %s36, %s25
      %p38 = scmp.ge.s32.totalorder %s37, 1
      %s39 = scalar_select %p38, 0, %s37
      %s40 = sadd.s32 1, %s24
      %s41 = scalar_select %p38, %s40, %s24
      %p42 = scmp.ge.s32.totalorder %s41, 2
      %s43 = scalar_select %p42, 0, %s41
      %s44 = sadd.s32 %s25, %s26
      %p45 = scmp.lt.s32.totalorder %s44, 0
      %s46 = scalar_select %p45, %s44, 0
      %s47 = sadd.s32 %s39, %s35
      %p48 = scmp.lt.s32.totalorder %s47, 0
      %s49 = scalar_select %p48, %s47, 0
      %s50 = ssub.s32 %s24, %s43
      %s51 = ssub.s32 %s46, %s49
      %s52 = sor.u32 %s50, %s51
      %p53 = scmp.eq.s32.totalorder %s52, 0
      %s55 = sadd.s32 %s54, 1
      %s56 = scalar_select %p53, %s54, %s55
      %p59 = pneg %p53
      %p60 = scmp.eq.s32.totalorder %s17, 1
      %p61 = por %p59, %p60
      %p62 = scmp.ne.s32.totalorder %s54, %s57
      %p63 = scmp.eq.s32.totalorder %s17, 0
      %p64 = por %p62, %p63
      %p65 = scmp.ne.s32.totalorder %s54, %s57
      %p66 = scmp.eq.s32.totalorder %s22, 1
      %p67 = por %p65, %p66
      %p68 = scmp.ne.s32.totalorder %s57, %s58
      %p69 = scmp.eq.s32.totalorder %s22, 0
      %p70 = por %p68, %p69
      %p71 = scmp.ne.s32.totalorder %s57, %s58
      %p72 = scmp.eq.s32.totalorder %s23, 1
      %p73 = por %p71, %p72
      %p75 = scmp.ne.s32.totalorder %s58, %s74
      %p76 = scmp.eq.s32.totalorder %s23, 0
      %p77 = por %p75, %p76
      %s78 = sadd.s32 %s25, %s26
      %p79 = scmp.lt.s32.totalorder %s78, 0
      %s80 = scalar_select %p79, %s78, 0
      %s81 = sadd.s32 %s39, %s35
      %p82 = scmp.lt.s32.totalorder %s81, 0
      %s83 = scalar_select %p82, %s81, 0
      %s84 = ssub.s32 %s24, %s43
      %s85 = ssub.s32 %s80, %s83
      %s86 = sor.u32 %s84, %s85
      %p87 = scmp.eq.s32.totalorder %s86, 0
      %s89 = sadd.s32 %s88, 1
      %s90 = scalar_select %p87, %s88, %s89
      %p93 = pneg %p87
      %p94 = scmp.eq.s32.totalorder %s17, 1
      %p95 = por %p93, %p94
      %p96 = scmp.ne.s32.totalorder %s88, %s91
      %p97 = scmp.eq.s32.totalorder %s17, 0
      %p98 = por %p96, %p97
      %p99 = scmp.ne.s32.totalorder %s88, %s91
      %p100 = scmp.eq.s32.totalorder %s22, 1
      %p101 = por %p99, %p100
      %p102 = scmp.ne.s32.totalorder %s91, %s92
      %p103 = scmp.eq.s32.totalorder %s22, 0
      %p104 = por %p102, %p103
      %p105 = scmp.ne.s32.totalorder %s91, %s92
      %p106 = scmp.eq.s32.totalorder %s23, 1
      %p107 = por %p105, %p106
      %p109 = scmp.ne.s32.totalorder %s92, %s108
      %p110 = scmp.eq.s32.totalorder %s23, 0
      %p111 = por %p109, %p110
      %s112 = ssub.s32 %s24, %s43
      %s113 = ssub.s32 %s25, %s39
      %s114 = sor.u32 %s112, %s113
      %p115 = scmp.eq.s32.totalorder %s114, 0
      %s117 = sadd.s32 %s116, 1
      %s118 = scalar_select %p115, %s116, %s117
      %p121 = pneg %p115
      %p122 = scmp.eq.s32.totalorder %s17, 1
      %p123 = por %p121, %p122
      %p124 = scmp.ne.s32.totalorder %s116, %s119
      %p125 = scmp.eq.s32.totalorder %s17, 0
      %p126 = por %p124, %p125
      %p127 = scmp.ne.s32.totalorder %s116, %s119
      %p128 = scmp.eq.s32.totalorder %s22, 1
      %p129 = por %p127, %p128
      %p130 = scmp.ne.s32.totalorder %s119, %s120
      %p131 = scmp.eq.s32.totalorder %s22, 0
      %p132 = por %p130, %p131
      %p133 = scmp.ne.s32.totalorder %s119, %s120
      %p134 = scmp.eq.s32.totalorder %s23, 1
      %p135 = por %p133, %p134
      %p137 = scmp.ne.s32.totalorder %s120, %s136
      %p138 = scmp.eq.s32.totalorder %s23, 0
      %p139 = por %p137, %p138
      %p140 = scmp.le.s32.totalorder 1, %s17
      %p141 = scmp.lt.s32.totalorder %s17, 3
      %p142 = pnand %p140, %p141
      %p143 = pneg %p142
      // Predicated region
      $region9: #{tpu_custom_call.1} parent=5 // pred_check
        _
      $region10: #{tpu_custom_call.1} parent=5 // pred_check_branch
        %145 = sbr.rel (%p142) target = $region12
      $region11: #{tpu_custom_call.1} parent=5 // pred_region
        %s146 = ssub.s32 %s17, 1
      $region12: #{tpu_custom_call.1} parent=5 // pred_fallthru
        _
      %p147 = scmp.lt.s32.totalorder %s17, 2
      // Predicated region
      $region13: #{tpu_custom_call.1} parent=5 // pred_check
        %p148 = pneg %p147
      $region14: #{tpu_custom_call.1} parent=5 // pred_check_branch
        %150 = sbr.rel (%p148) target = $region16
      $region15: #{tpu_custom_call.1} parent=5 // pred_region
        // Predicated region
        $region17: #{tpu_custom_call.1} parent=15 // pred_check
          %p151 = pneg %p64
        $region18: #{tpu_custom_call.1} parent=15 // pred_check_branch
          %153 = sbr.rel (%p151) target = $region20
        $region19: #{tpu_custom_call.1} parent=15 // pred_region
          %s154 = sand.u32 %s54, 1
          %s155 = scalar_lea.sflag [#allocation3], %s154
          %s156 = sand.u32 %s54, 1
          %s157 = smul.addr %s156, 8
          %s158 = scalar_lea.vmem [#allocation2], %s157
          %s159 = sadd.s32 %s25, %s26
          %p160 = scmp.lt.s32.totalorder %s159, 0
          %s161 = scalar_select %p160, %s159, 0
          %s163 = ssub.s32 128, 128
          %164 = vsyncadd %s155, %s163
          %s165 = sadd.s32 %s161, %s24
          %s166 = smul.addr %s165, 128
          %s167 = scalar_lea.hbm %s0, %s166
          %s169 = sshll.u32 %s158, 4
          %s170 = int_to_ptr.vmem [resolvable:$true] %s169
          %172 = dma.hbm_to_vmem [thread:$0]  %s167, 128, %s170, %s155
        $region20: #{tpu_custom_call.1} parent=15 // pred_fallthru
          _
        // Predicated region
        $region21: #{tpu_custom_call.1} parent=15 // pred_check
          %p173 = pneg %p98
        $region22: #{tpu_custom_call.1} parent=15 // pred_check_branch
          %175 = sbr.rel (%p173) target = $region24
        $region23: #{tpu_custom_call.1} parent=15 // pred_region
          %s176 = sand.u32 %s88, 1
          %s177 = scalar_lea.sflag [#allocation6], %s176
          %s178 = sand.u32 %s88, 1
          %s179 = smul.addr %s178, 4
          %s180 = scalar_lea.vmem [#allocation5], %s179
          %s181 = sadd.s32 %s25, %s26
          %p182 = scmp.lt.s32.totalorder %s181, 0
          %s183 = scalar_select %p182, %s181, 0
          %s185 = ssub.s32 64, 64
          %186 = vsyncadd %s177, %s185
          %s187 = sadd.s32 %s183, %s24
          %s188 = smul.addr %s187, 64
          %s189 = scalar_lea.hbm %s1, %s188
          %s191 = sshll.u32 %s180, 4
          %s192 = int_to_ptr.vmem [resolvable:$true] %s191
          %194 = dma.hbm_to_vmem [thread:$0]  %s189, 64, %s192, %s177
        $region24: #{tpu_custom_call.1} parent=15 // pred_fallthru
          _
      $region16: #{tpu_custom_call.1} parent=5 // pred_fallthru
        _
      %p195 = scmp.le.s32.totalorder 1, %s17
      %p196 = scmp.lt.s32.totalorder %s17, 3
      %p197 = pnand %p195, %p196
      %p198 = pneg %p197
      // Predicated region
      $region25: #{tpu_custom_call.1} parent=5 // pred_check
        _
      $region26: #{tpu_custom_call.1} parent=5 // pred_check_branch
        %200 = sbr.rel (%p197) target = $region28
      $region27: #{tpu_custom_call.1} parent=5 // pred_region
        %s201 = ssub.s32 %s17, 1
        %s202 = sand.u32 %s57, 1
        %s203 = scalar_lea.sflag [#allocation3], %s202
        %s204 = sand.u32 %s57, 1
        %s205 = smul.addr %s204, 8
        %s206 = scalar_lea.vmem [#allocation2], %s205
        // Predicated region
        $region29: #{tpu_custom_call.1} parent=27 // pred_check
          %p207 = pneg %p70
        $region30: #{tpu_custom_call.1} parent=27 // pred_check_branch
          %209 = sbr.rel (%p207) target = $region32
        $region31: #{tpu_custom_call.1} parent=27 // pred_region
          %210 = dma.done %s203, 128
        $region32: #{tpu_custom_call.1} parent=27 // pred_fallthru
          _
        %s211 = sand.u32 %s91, 1
        %s212 = scalar_lea.sflag [#allocation6], %s211
        %s213 = sand.u32 %s91, 1
        %s214 = smul.addr %s213, 4
        %s215 = scalar_lea.vmem [#allocation5], %s214
        // Predicated region
        $region33: #{tpu_custom_call.1} parent=27 // pred_check
          %p216 = pneg %p104
        $region34: #{tpu_custom_call.1} parent=27 // pred_check_branch
          %218 = sbr.rel (%p216) target = $region36
        $region35: #{tpu_custom_call.1} parent=27 // pred_region
          %219 = dma.done %s212, 64
        $region36: #{tpu_custom_call.1} parent=27 // pred_fallthru
          _
        %s220 = sand.u32 %s57, 1
        %s221 = scalar_lea.sflag [#allocation3], %s220
        %s222 = sand.u32 %s57, 1
        %s223 = smul.addr %s222, 8
        %s224 = scalar_lea.vmem [#allocation2], %s223
        %p225 = pneg %p70
        %p226 = pneg %p67
        %s227 = sand.u32 %s91, 1
        %s228 = scalar_lea.sflag [#allocation6], %s227
        %s229 = sand.u32 %s91, 1
        %s230 = smul.addr %s229, 4
        %s231 = scalar_lea.vmem [#allocation5], %s230
        %p232 = pneg %p104
        %p233 = pneg %p101
        %p234 = pneg %p132
        %p235 = pneg %p129
        %s236 = sand.u32 %s119, 1
        %s237 = scalar_lea.sflag [#allocation4], %s236
        %s238 = sand.u32 %s119, 1
        %s239 = scalar_lea.vmem [#allocation7], %s238
        %s240 = sadd.s32 %s28, %s29
        %p241 = scmp.lt.s32.totalorder %s240, 0
        %s242 = scalar_select %p241, %s240, 0
        %s243 = sadd.s32 %s28, %s29
        %p244 = scmp.lt.s32.totalorder %s243, 0
        %s245 = scalar_select %p244, %s243, 0
        %p246 = scmp.eq.s32.totalorder %s29, 0
        // Predicated region
        $region37: #{tpu_custom_call.1} parent=27 // pred_check
          %p247 = pneg %p246
        $region38: #{tpu_custom_call.1} parent=27 // pred_check_branch
          %249 = sbr.rel (%p247) target = $region40
        $region39: #{tpu_custom_call.1} parent=27 // pred_region
          %250 = vst [vmem:[%s239] sm:$0x1] 0.0
        $region40: #{tpu_custom_call.1} parent=27 // pred_fallthru
          _
        %v251 = vld [vmem:[%s206] sm:$0xff]
        %v252 = vld [vmem:[%s215] sm:$0xf]
        %v253 = vunpack.c.l.bf16 %v252
        %vm254 = vcmp.ne.f32.partialorder %v253, -1.0
        %vm255 = vcmp.gt.f32.partialorder %v253, 0.5
        %v256 = vsub.f32 1.0, %v251
        %v257 = vsel %vm255, %v251, %v256
        %v258 = vadd.f32 %v257, 1e-12
        %v259 = vlog2.pop %v258
        %v260 = vmul.f32 %v259, 0.6931472
        %v261 = vsub.f32 0.0, %v260
        %v262 = vsel %vm254, %v261, 0.0
        %v263 = vld [vmem:[%s239] sm:$0x1]
        %v264 = vrot.slane %v262, 4
        %v265 = vadd.f32 %v262, %v264
        %v266 = vrot.slane %v265, 2
        %v267 = vadd.f32 %v265, %v266
        %v268 = vrot.slane %v267, 1
        %v269 = vadd.f32 %v267, %v268
        %v270 = vadd.f32 %v263, %v269
        %271 = vst [vmem:[%s239] sm:$0x1] %v270
        %s272 = sand.u32 %s119, 1
        %s273 = scalar_lea.sflag [#allocation4], %s272
        %s274 = sand.u32 %s119, 1
        %s275 = scalar_lea.vmem [#allocation7], %s274
        // Predicated region
        $region41: #{tpu_custom_call.1} parent=27 // pred_check
          %p276 = pneg %p129
        $region42: #{tpu_custom_call.1} parent=27 // pred_check_branch
          %278 = sbr.rel (%p276) target = $region44
        $region43: #{tpu_custom_call.1} parent=27 // pred_region
          %s280 = ssub.s32 16, 16
          %281 = vsyncadd %s273, %s280
          %s282 = sadd.s32 %s28, %s27
          %s283 = smul.addr %s282, 16
          %s284 = scalar_lea.hbm %s2, %s283
          %s286 = sshll.u32 %s275, 4
          %s287 = int_to_ptr.vmem [resolvable:$true] %s286
          %289 = dma.vmem_to_hbm [thread:$0]  %s287, 16, %s284, %s273
        $region44: #{tpu_custom_call.1} parent=27 // pred_fallthru
          _
      $region28: #{tpu_custom_call.1} parent=5 // pred_fallthru
        _
      %p290 = scmp.le.s32.totalorder 2, %s17
      // Predicated region
      $region45: #{tpu_custom_call.1} parent=5 // pred_check
        %p291 = pneg %p290
      $region46: #{tpu_custom_call.1} parent=5 // pred_check_branch
        %293 = sbr.rel (%p291) target = $region48
      $region47: #{tpu_custom_call.1} parent=5 // pred_region
        %s294 = ssub.s32 %s17, 2
        // Predicated region
        $region49: #{tpu_custom_call.1} parent=47 // pred_check
          %p295 = pneg %p135
        $region50: #{tpu_custom_call.1} parent=47 // pred_check_branch
          %297 = sbr.rel (%p295) target = $region52
        $region51: #{tpu_custom_call.1} parent=47 // pred_region
          %s298 = sand.u32 %s120, 1
          %s299 = scalar_lea.sflag [#allocation4], %s298
          %s300 = sand.u32 %s120, 1
          %s301 = scalar_lea.vmem [#allocation7], %s300
          %302 = dma.done %s299, 16
        $region52: #{tpu_custom_call.1} parent=47 // pred_fallthru
          _
      $region48: #{tpu_custom_call.1} parent=5 // pred_fallthru
        _
    $region6: #{tpu_custom_call.1} parent=1 // loop_footer
      %s21 = sadd.s32 1, %s17
    $region7: #{tpu_custom_call.1} parent=1 // loop_footer_branch
      %16 = sbr.rel target = $region3
    $region8: #{tpu_custom_call.1} parent=1 // loop_exit
      _
    %303 = vsyncpa [#allocation3], 1
    %s304 = scalar_lea.sflag [#allocation3], 1
    %305 = vsyncpa %s304, 1
    %306 = vsyncpa [#allocation6], 1
    %s307 = scalar_lea.sflag [#allocation6], 1
    %308 = vsyncpa %s307, 1
    %309 = vsyncpa [#allocation4], 1
    %s310 = scalar_lea.sflag [#allocation4], 1
    %311 = vsyncpa %s310, 1

</llo_original>
